<compile_context>
chip_gen: v6e
topology: v6e:2x2x1
jax: 0.10.0
libtpu: 0.0.40
codegen_flags: <defaults>
</compile_context>

<pallas_src>
import jax
import jax.numpy as jnp
from jax.experimental import pallas as pl
from jax.experimental.pallas import tpu as pltpu

OUT_SIZES = (6, 1, 1, 1)
NOUT = sum(OUT_SIZES)  # 9


def _decoder_kernel(x_ref, w_ref, b_ref, o_ref):
    # x_ref: (tb, D)   w_ref: (D, 9)   b_ref: (1, 9)   o_ref: (tb, 9)
    acc = jnp.dot(x_ref[...], w_ref[...], preferred_element_type=jnp.float32)
    o_ref[...] = (acc + b_ref[...]).astype(o_ref.dtype)


def _choose_batch_tile(B):
    """Batch tile: full extent for small/medium B (always layout-legal since a
    full-extent block is allowed even if B isn't a multiple of 8); cap at 4096
    rows for large B (~8 MiB double-buffered -> fits v5e's 16 MiB scoped-VMEM
    default and is far below v6e/v7x limits)."""
    if B <= 4096:
        return B
    return 4096  # multiple of 8; partial boundary block handled by Pallas


def decoder_forward(x, w_cat, b_cat):
    """Fused forward of the 4 linear layers.

    x:     (B, D)  float32
    w_cat: (D, 9)  float32   (concat of the 4 layers' W.T along axis 1)
    b_cat: (1, 9)  float32
    returns list of 4 arrays with shapes (B,6), (B,1), (B,1), (B,1)
    """
    B, D = x.shape
    tb = _choose_batch_tile(B)
    grid = (pl.cdiv(B, tb),)  # no padding: boundary block is masked by Pallas

    fused = pl.pallas_call(
        _decoder_kernel,
        out_shape=jax.ShapeDtypeStruct((B, NOUT), x.dtype),
        grid=grid,
        in_specs=[
            pl.BlockSpec((tb, D), lambda i: (i, 0)),      # x: tiled over batch
            pl.BlockSpec((D, NOUT), lambda i: (0, 0)),    # weights: resident
            pl.BlockSpec((1, NOUT), lambda i: (0, 0)),    # bias: resident
        ],
        out_specs=pl.BlockSpec((tb, NOUT), lambda i: (i, 0)),
        compiler_params=pltpu.CompilerParams(
            # Grid iterations are independent -> shard across v7x's 2 TCs
            # whenever there is more than one step.
            dimension_semantics=("parallel",)
        ),
    )(x, w_cat, b_cat)

    # Split the fused (B, 9) slab into the 4 per-layer outputs (cheap XLA
    # slices, no extra kernel work / masked stores).
    outs = []
    start = 0
    for o in OUT_SIZES:
        outs.append(fused[:, start:start + o])
        start += o
    return outs


def make_decoder_params(rgru_hid_size, key):
    """Deterministically initialize the 4 Linear layers (PyTorch shapes:
    W_i: (out_i, D), b_i: (out_i,)) and concatenate into (D, 9) / (1, 9)."""
    D = rgru_hid_size * (rgru_hid_size + 1) // 2
    ws, bs = [], []
    bound = 1.0 / float(jnp.sqrt(jnp.float32(D)))
    for i, o in enumerate(OUT_SIZES):
        kw, kb = jax.random.split(jax.random.fold_in(key, i))
        W = jax.random.uniform(kw, (o, D), jnp.float32, -bound, bound)
        b = jax.random.uniform(kb, (o,), jnp.float32, -bound, bound)
        ws.append(W)
        bs.append(b)
    w_cat = jnp.concatenate([W.T for W in ws], axis=1)          # (D, 9)
    b_cat = jnp.concatenate(bs, axis=0).reshape(1, -1)          # (1, 9)
    return ws, bs, w_cat, b_cat


if __name__ == "__main__":
    rgru_hid_size = 8                       # D = 8*9//2 = 36
    B = 8                                   # small batch
    D = rgru_hid_size * (rgru_hid_size + 1) // 2

    key = jax.random.PRNGKey(0)
    kx, kp = jax.random.split(key)
    x = jax.random.normal(kx, (B, D), jnp.float32)
    ws, bs, w_cat, b_cat = make_decoder_params(rgru_hid_size, kp)

    outs = decoder_forward(x, w_cat, b_cat)
    outs = [jax.block_until_ready(o) for o in outs]

    # Reference check against plain JAX (same math as torch Linear: x @ W.T + b)
    refs = [x @ W.T + b for W, b in zip(ws, bs)]
    for o, r in zip(outs, refs):
        assert o.shape == r.shape
        assert jnp.allclose(o, r, atol=1e-5, rtol=1e-5)

    print("KERNEL_OK")
</pallas_src>

<mosaic_0001>
module attributes {stable_mosaic.version = 11 : i64} {
  func.func @_decoder_kernel(%arg0: i32, %arg1: memref<8x36xf32, #tpu.memory_space<vmem>>, %arg2: memref<36x9xf32, #tpu.memory_space<vmem>>, %arg3: memref<1x9xf32, #tpu.memory_space<vmem>>, %arg4: memref<8x9xf32, #tpu.memory_space<vmem>>) attributes {dimension_semantics = [#tpu.dimension_semantics<parallel>], iteration_bounds = array<i64: 1>, scalar_prefetch = 0 : i64, scratch_operands = 0 : i64, tpu.core_type = #tpu.core_type<tc>, window_params = [{transform_indices = @transform_0, window_bounds = array<i64: 8, 36>}, {pipeline_mode = #tpu.pipeline_mode<synchronous>, transform_indices = @transform_1, window_bounds = array<i64: 36, 9>}, {pipeline_mode = #tpu.pipeline_mode<synchronous>, transform_indices = @transform_2, window_bounds = array<i64: 1, 9>}, {transform_indices = @transform_3, window_bounds = array<i64: 8, 9>}]} {
    %c0 = arith.constant 0 : index
    %c0_0 = arith.constant 0 : index
    %0 = vector.load %arg1[%c0, %c0_0] : memref<8x36xf32, #tpu.memory_space<vmem>>, vector<8x36xf32>
    %c0_1 = arith.constant 0 : index
    %c0_2 = arith.constant 0 : index
    %1 = vector.load %arg2[%c0_1, %c0_2] : memref<36x9xf32, #tpu.memory_space<vmem>>, vector<36x9xf32>
    %cst = arith.constant dense<0.000000e+00> : vector<8x9xf32>
    %2 = tpu.matmul %0, %1, %cst {dimension_numbers = #tpu.dot_dimension_numbers<[1], [0], [0], [1], [0, 0, 1, 1], [], []>} : vector<8x36xf32>, vector<36x9xf32>, vector<8x9xf32> -> vector<8x9xf32>
    %c0_3 = arith.constant 0 : index
    %c0_4 = arith.constant 0 : index
    %3 = vector.load %arg3[%c0_3, %c0_4] : memref<1x9xf32, #tpu.memory_space<vmem>>, vector<1x9xf32>
    %4 = vector.broadcast %3 : vector<1x9xf32> to vector<8x9xf32>
    %5 = arith.addf %2, %4 : vector<8x9xf32>
    %c0_5 = arith.constant 0 : index
    %c0_6 = arith.constant 0 : index
    %6 = vector.load %arg4[%c0_5, %c0_6] : memref<8x9xf32, #tpu.memory_space<vmem>>, vector<8x9xf32>
    tpu.vector_store %arg4[%c0_5, %c0_6], %5 {strides = array<i32>} : memref<8x9xf32, #tpu.memory_space<vmem>>, vector<8x9xf32>,
    return
  }
  func.func @transform_0(%arg0: i32) -> (i32, i32) {
    %c0_i32 = arith.constant 0 : i32
    %c0_i32_0 = arith.constant 0 : i32
    return %arg0, %c0_i32 : i32, i32
  }
  func.func @transform_1(%arg0: i32) -> (i32, i32) {
    %c0_i32 = arith.constant 0 : i32
    %c0_i32_0 = arith.constant 0 : i32
    %c0_i32_1 = arith.constant 0 : i32
    return %c0_i32, %c0_i32_0 : i32, i32
  }
  func.func @transform_2(%arg0: i32) -> (i32, i32) {
    %c0_i32 = arith.constant 0 : i32
    %c0_i32_0 = arith.constant 0 : i32
    %c0_i32_1 = arith.constant 0 : i32
    return %c0_i32, %c0_i32_0 : i32, i32
  }
  func.func @transform_3(%arg0: i32) -> (i32, i32) {
    %c0_i32 = arith.constant 0 : i32
    %c0_i32_0 = arith.constant 0 : i32
    return %arg0, %c0_i32 : i32, i32
  }
}

</mosaic_0001>

<llo_original>
// kernel: tpu_custom_call.1
$region0: #{tpu_custom_call.1}
  #allocation0 [shape = 'u32[]', space=smem, size = 0x4, offset = 0x4, fixed_abs, tag = 'smem constant byte address 0x4 - core index']
  #allocation1 [shape = 'u32[144,128]{1,0:T(1,128)}', space=vmem, size = 0x12000, scoped, tag = 'internal scratch']
  %s0 = inlined_call_operand.vmem [shape: f32[8,36], index: 0, kind: input, shape index: {}]
  %s1 = inlined_call_operand.vmem [shape: f32[36,9], index: 1, kind: input, shape index: {}]
  %s2 = inlined_call_operand.vmem [shape: f32[1,9], index: 2, kind: input, shape index: {}]
  %s3 = inlined_call_operand.hbm [shape: f32[8,9], index: 3, kind: output, shape index: {}]
  %s4 = sld [smem:[#allocation0]]
  $region22: #{tpu_custom_call.1} parent=0
    _
  %s6 = ssub.s32 1, %s4
  %s7 = scalar_select 0, %s6, %s4
  $region1: #{tpu_custom_call.1} parent=0
    #allocation2 [shape = 'u8[4096]{0}', space=vmem, size = 0x1000, scoped, tag = 'output window, operand 0, single buffered']
    #allocation3 [shape = 's32[1]{0}', space=sflag, size = 0x4, scoped, tag = 'scoped memory for tpu_custom_call.1']
    %8 = vsyncpa [#allocation3], 0
    // Predicated region
    $region2: #{tpu_custom_call.1} parent=1 // pred_check
      _
    $region3: #{tpu_custom_call.1} parent=1 // pred_check_branch
      %10 = sbr.rel (0) target = $region5
    $region4: #{tpu_custom_call.1} parent=1 // pred_region
      _
    $region5: #{tpu_custom_call.1} parent=1 // pred_fallthru
      _
    // Predicated region
    $region6: #{tpu_custom_call.1} parent=1 // pred_check
      _
    $region7: #{tpu_custom_call.1} parent=1 // pred_check_branch
      %12 = sbr.rel (0) target = $region9
    $region8: #{tpu_custom_call.1} parent=1 // pred_region
      _
    $region9: #{tpu_custom_call.1} parent=1 // pred_fallthru
      _
    // Predicated region
    $region10: #{tpu_custom_call.1} parent=1 // pred_check
      _
    $region11: #{tpu_custom_call.1} parent=1 // pred_check_branch
      %14 = sbr.rel (0) target = $region13
    $region12: #{tpu_custom_call.1} parent=1 // pred_region
      _
    $region13: #{tpu_custom_call.1} parent=1 // pred_fallthru
      _
    %v15 = vld [vmem:[%s0] sm:$0xff]
    %v16 = vld [vmem:[%s1] sm:$0xff]
    %v17 = vld [vmem:[%s1 + $0x8] sm:$0xff]
    %v18 = vld [vmem:[%s1 + $0x10] sm:$0xff]
    %v19 = vld [vmem:[%s1 + $0x18] sm:$0xff]
    %v20 = vld [vmem:[%s1 + $0x20] sm:$0xf]
    %v21 = vld [vmem:[%s2] sm:$0x1]
    %v23 = vlaneseq
    %v24 = vshrl.u32 %v23, 7
    %v25 = vsub.s32 0, %v24
    %v26 = vrot.slane %v21, %v25
    %vm28 = vcmask 293888
    %v30 = vsel %vm28, %v15, 0
    %vm32 = vcmask 1043456
    %v34 = vsel %vm32, %v20, 0
    %36 = vmatprep.subr.mxu0 0.0
    %37 = vmatpush1.msra.mxu0 0.0
    %38 = vmatprep.subr.mxu0 0.0
    %39 = vmatpush1.msra.mxu0 0.0
    %40 = vmatprep.subr.mxu0 0.0
    %41 = vmatpush1.msra.mxu0 0.0
    %42 = vmatprep.subr.mxu0 0.0
    %43 = vmatpush1.msra.mxu0 0.0
    %44 = vmatprep.subr.mxu0 0.0
    %45 = vmatpush1.msra.mxu0 0.0
    %46 = vmatprep.subr.mxu0 0.0
    %47 = vmatpush1.msra.mxu0 0.0
    %48 = vmatprep.subr.mxu0 0.0
    %49 = vmatpush1.msra.mxu0 0.0
    %50 = vmatprep.subr.mxu0 0.0
    %51 = vmatpush1.msra.mxu0 0.0
    %52 = vmatprep.subr.mxu0 0.0
    %53 = vmatpush1.msra.mxu0 0.0
    %54 = vmatprep.subr.mxu0 0.0
    %55 = vmatpush1.msra.mxu0 0.0
    %56 = vmatprep.subr.mxu0 0.0
    %57 = vmatpush1.msra.mxu0 0.0
    %58 = vmatprep.subr.mxu0 0.0
    %59 = vmatpush1.msra.mxu0 %v34
    %60 = vmatprep.subr.mxu0 0.0
    %61 = vmatpush1.msra.mxu0 %v19
    %62 = vmatprep.subr.mxu0 0.0
    %63 = vmatpush1.msra.mxu0 %v18
    %64 = vmatprep.subr.mxu0 0.0
    %65 = vmatpush1.msra.mxu0 %v17
    %66 = vmatprep.subr.mxu0 0.0
    %67 = vmatpush1.msra.mxu0 %v16
    %68 = vmatprep.subr.mxu0 0.0
    %69 = vmatpush2.msra.mxu0 0.0
    %70 = vmatprep.subr.mxu0 0.0
    %71 = vmatpush2.msra.mxu0 0.0
    %72 = vmatprep.subr.mxu0 0.0
    %73 = vmatpush2.msra.mxu0 0.0
    %74 = vmatprep.subr.mxu0 0.0
    %75 = vmatpush2.msra.mxu0 0.0
    %76 = vmatprep.subr.mxu0 0.0
    %77 = vmatpush2.msra.mxu0 0.0
    %78 = vmatprep.subr.mxu0 0.0
    %79 = vmatpush2.msra.mxu0 0.0
    %80 = vmatprep.subr.mxu0 0.0
    %81 = vmatpush2.msra.mxu0 0.0
    %82 = vmatprep.subr.mxu0 0.0
    %83 = vmatpush2.msra.mxu0 0.0
    %84 = vmatprep.subr.mxu0 0.0
    %85 = vmatpush2.msra.mxu0 0.0
    %86 = vmatprep.subr.mxu0 0.0
    %87 = vmatpush2.msra.mxu0 0.0
    %88 = vmatprep.subr.mxu0 0.0
    %89 = vmatpush2.msra.mxu0 0.0
    %90 = vmatprep.subr.mxu0 0.0
    %91 = vmatpush2.msra.mxu0 0.0
    %92 = vmatprep.subr.mxu0 0.0
    %93 = vmatpush2.msra.mxu0 0.0
    %94 = vmatprep.subr.mxu0 0.0
    %95 = vmatpush2.msra.mxu0 0.0
    %96 = vmatprep.subr.mxu0 0.0
    %97 = vmatpush2.msra.mxu0 0.0
    %98 = vmatprep.subr.mxu0 0.0
    %99 = vmatpush2.msra.mxu0 0.0
    %100 = vmatprep.mubr.f32.mxu0 0.0
    %101 = vmatmul.mubr.f32.gmra.mxu0 %v30
    %v102 = vpop.f32.mrf.mxu0
    %v103 = vadd.f32 %v26, %v102
    %v104 = vpop.f32.mrf.mxu0
    %105 = vdwg.mxu0
    %vm106 = vcmask 72704
    %107 = vst.msk [vmem:[#allocation2] sm:$0xff] %vm106, %v103
    // Predicated region
    $region14: #{tpu_custom_call.1} parent=1 // pred_check
      _
    $region15: #{tpu_custom_call.1} parent=1 // pred_check_branch
      %109 = sbr.rel (0) target = $region17
    $region16: #{tpu_custom_call.1} parent=1 // pred_region
      %s111 = ssub.s32 128, 128
      %112 = vsyncadd [#allocation3], %s111
      %s114 = sshll.u32 [#allocation2], 4
      %s115 = int_to_ptr.vmem [resolvable:$true] %s114
      %117 = dma.vmem_to_hbm [thread:$0]  %s115, 128, %s3, [#allocation3]
    $region17: #{tpu_custom_call.1} parent=1 // pred_fallthru
      _
    // Predicated region
    $region18: #{tpu_custom_call.1} parent=1 // pred_check
      _
    $region19: #{tpu_custom_call.1} parent=1 // pred_check_branch
      %119 = sbr.rel (0) target = $region21
    $region20: #{tpu_custom_call.1} parent=1 // pred_region
      %120 = dma.done [#allocation3], 128
    $region21: #{tpu_custom_call.1} parent=1 // pred_fallthru
      _
    %121 = vsyncpa [#allocation3], 1

</llo_original>
